<compile_context>
chip_gen: v5e
topology: v5e:2x2
jax: 0.10.0
libtpu: 0.0.40
codegen_flags: <defaults>
</compile_context>

<pallas_src>
import functools

import jax
import jax.numpy as jnp
from jax.experimental import pallas as pl
from jax.experimental.pallas import tpu as pltpu

K = 3  # MaxPool2d kernel_size (stride defaults to kernel_size in PyTorch)


def _maxpool_kernel(x_ref, o_ref, *, taps):
    # x_ref: (taps, THo, Wo, TB)  -- taps = K*K window elements, leading dim
    # o_ref: (THo, Wo, TB)
    r = x_ref[0]
    for t in range(1, taps):          # static unroll: 8 VPU maxima, no XLU
        r = jnp.maximum(r, x_ref[t])
    o_ref[...] = r


def maxpool2d_ceil(x, *, block_rows=None, block_lanes=None):
    """PoolNeuralNetwork.forward: MaxPool2d(kernel_size=3, ceil_mode=True).

    x: (N, C, H, W). Returns (N, C, Ho, Wo), Ho = ceil(H/3), Wo = ceil(W/3).
    """
    N, C, H, W = x.shape
    B = N * C
    # With padding=0 the PyTorch "drop the last window if it starts past the
    # input" rule can never fire, so ceil division is exact.
    Ho = -(-H // K)
    Wo = -(-W // K)
    dtype = x.dtype
    itemsize = dtype.itemsize

    if jnp.issubdtype(dtype, jnp.floating):
        fill = float("-inf")
    else:  # PyTorch MaxPool2d is float-only; ints handled for completeness.
        fill = int(jnp.iinfo(dtype).min)

    Hp, Wp = Ho * K, Wo * K
    if Hp != H or Wp != W:
        # ceil_mode tail: pad <=2 rows / <=2 cols with -inf so ragged windows
        # ignore out-of-range elements (fuses with the transpose below).
        x = jnp.pad(x, ((0, 0), (0, 0), (0, Hp - H), (0, Wp - W)),
                    constant_values=fill)

    # NCHW -> (K*K, Ho, Wo, N*C): pooling taps on the leading dim, N*C on lanes.
    xt = x.reshape(N, C, Ho, K, Wo, K)
    xt = jnp.transpose(xt, (3, 5, 2, 4, 0, 1)).reshape(K * K, Ho, Wo, B)

    # ---- tile-size selection: ~2 MiB input blocks (>85% of HBM roofline per
    #      measured data) while double-buffering well under the 16/32 MiB
    #      default scoped-VMEM limits of v5e/v6e/v7x. ----
    target_bytes = 2 * 1024 * 1024
    if block_lanes is not None:
        TB = block_lanes
    elif B <= 1024:
        TB = B                                    # full dim: always legal
    else:
        TB = 1024                                 # multiple of 128
        while TB > 128 and K * K * Wo * TB * itemsize > target_bytes:
            TB //= 2
    # TODO(synk): for extremely wide images (K*K*Wo*TB*itemsize >> a few MiB)
    # also tile the Wo axis with a third grid dimension.
    if block_rows is not None:
        THo = block_rows
    else:
        row_bytes = K * K * Wo * TB * itemsize
        THo = max(1, min(Ho, target_bytes // row_bytes))
    n_b = pl.cdiv(B, TB)
    n_h = pl.cdiv(Ho, THo)
    if n_b * n_h == 1 and Ho > 1:
        # Ensure >=2 grid steps so DMA/compute software pipelining is active.
        THo = pl.cdiv(Ho, 2)
        n_h = pl.cdiv(Ho, THo)

    out_elems = Ho * Wo * B
    out = pl.pallas_call(
        functools.partial(_maxpool_kernel, taps=K * K),
        out_shape=jax.ShapeDtypeStruct((Ho, Wo, B), dtype),
        grid=(n_b, n_h),
        in_specs=[pl.BlockSpec((K * K, THo, Wo, TB),
                               lambda b, h: (0, h, 0, b))],
        out_specs=pl.BlockSpec((THo, Wo, TB), lambda b, h: (h, 0, b)),
        compiler_params=pltpu.CompilerParams(
            dimension_semantics=("parallel", "parallel")),
        cost_estimate=pl.CostEstimate(
            flops=(K * K - 1) * out_elems,
            transcendentals=0,
            bytes_accessed=(K * K + 1) * out_elems * itemsize),
    )(xt)

    # (Ho, Wo, N*C) -> NCHW
    return jnp.transpose(out.reshape(Ho, Wo, N, C), (2, 3, 0, 1))


if __name__ == "__main__":
    key = jax.random.PRNGKey(0)
    # small NCHW input consistent with the module's forward
    x = jax.random.normal(key, (2, 4, 16, 16), dtype=jnp.float32)

    pool = jax.jit(maxpool2d_ceil)
    y = jax.block_until_ready(pool(x))

    # pure-JAX reference: pad with -inf, reduce non-overlapping 3x3 blocks
    N, C, H, W = x.shape
    Ho, Wo = -(-H // K), -(-W // K)
    xp = jnp.pad(x, ((0, 0), (0, 0), (0, Ho * K - H), (0, Wo * K - W)),
                 constant_values=float("-inf"))
    ref = xp.reshape(N, C, Ho, K, Wo, K).max(axis=(3, 5))

    assert y.shape == (N, C, Ho, Wo), y.shape
    assert bool(jnp.allclose(y, ref)), "mismatch vs reference max-pool"
    print("KERNEL_OK")
</pallas_src>

<mosaic_0001>
module attributes {stable_mosaic.version = 11 : i64} {
  func.func @_maxpool_kernel(%arg0: i32, %arg1: i32, %arg2: memref<9x3x6x8xf32, #tpu.memory_space<vmem>>, %arg3: memref<3x6x8xf32, #tpu.memory_space<vmem>>) attributes {dimension_semantics = [#tpu.dimension_semantics<parallel>, #tpu.dimension_semantics<parallel>], iteration_bounds = array<i64: 1, 2>, scalar_prefetch = 0 : i64, scratch_operands = 0 : i64, tpu.core_type = #tpu.core_type<tc>, window_params = [{transform_indices = @transform_0, window_bounds = array<i64: 9, 3, 6, 8>}, {transform_indices = @transform_1, window_bounds = array<i64: 3, 6, 8>}]} {
    %c0 = arith.constant 0 : index
    %c0_0 = arith.constant 0 : index
    %c0_1 = arith.constant 0 : index
    %c0_2 = arith.constant 0 : index
    %0 = vector.load %arg2[%c0, %c0_0, %c0_1, %c0_2] : memref<9x3x6x8xf32, #tpu.memory_space<vmem>>, vector<1x3x6x8xf32>
    %1 = vector.shape_cast %0 : vector<1x3x6x8xf32> to vector<3x6x8xf32>
    %c1 = arith.constant 1 : index
    %c0_3 = arith.constant 0 : index
    %c0_4 = arith.constant 0 : index
    %c0_5 = arith.constant 0 : index
    %2 = vector.load %arg2[%c1, %c0_3, %c0_4, %c0_5] : memref<9x3x6x8xf32, #tpu.memory_space<vmem>>, vector<1x3x6x8xf32>
    %3 = vector.shape_cast %2 : vector<1x3x6x8xf32> to vector<3x6x8xf32>
    %4 = arith.maximumf %1, %3 : vector<3x6x8xf32>
    %c2 = arith.constant 2 : index
    %c0_6 = arith.constant 0 : index
    %c0_7 = arith.constant 0 : index
    %c0_8 = arith.constant 0 : index
    %5 = vector.load %arg2[%c2, %c0_6, %c0_7, %c0_8] : memref<9x3x6x8xf32, #tpu.memory_space<vmem>>, vector<1x3x6x8xf32>
    %6 = vector.shape_cast %5 : vector<1x3x6x8xf32> to vector<3x6x8xf32>
    %7 = arith.maximumf %4, %6 : vector<3x6x8xf32>
    %c3 = arith.constant 3 : index
    %c0_9 = arith.constant 0 : index
    %c0_10 = arith.constant 0 : index
    %c0_11 = arith.constant 0 : index
    %8 = vector.load %arg2[%c3, %c0_9, %c0_10, %c0_11] : memref<9x3x6x8xf32, #tpu.memory_space<vmem>>, vector<1x3x6x8xf32>
    %9 = vector.shape_cast %8 : vector<1x3x6x8xf32> to vector<3x6x8xf32>
    %10 = arith.maximumf %7, %9 : vector<3x6x8xf32>
    %c4 = arith.constant 4 : index
    %c0_12 = arith.constant 0 : index
    %c0_13 = arith.constant 0 : index
    %c0_14 = arith.constant 0 : index
    %11 = vector.load %arg2[%c4, %c0_12, %c0_13, %c0_14] : memref<9x3x6x8xf32, #tpu.memory_space<vmem>>, vector<1x3x6x8xf32>
    %12 = vector.shape_cast %11 : vector<1x3x6x8xf32> to vector<3x6x8xf32>
    %13 = arith.maximumf %10, %12 : vector<3x6x8xf32>
    %c5 = arith.constant 5 : index
    %c0_15 = arith.constant 0 : index
    %c0_16 = arith.constant 0 : index
    %c0_17 = arith.constant 0 : index
    %14 = vector.load %arg2[%c5, %c0_15, %c0_16, %c0_17] : memref<9x3x6x8xf32, #tpu.memory_space<vmem>>, vector<1x3x6x8xf32>
    %15 = vector.shape_cast %14 : vector<1x3x6x8xf32> to vector<3x6x8xf32>
    %16 = arith.maximumf %13, %15 : vector<3x6x8xf32>
    %c6 = arith.constant 6 : index
    %c0_18 = arith.constant 0 : index
    %c0_19 = arith.constant 0 : index
    %c0_20 = arith.constant 0 : index
    %17 = vector.load %arg2[%c6, %c0_18, %c0_19, %c0_20] : memref<9x3x6x8xf32, #tpu.memory_space<vmem>>, vector<1x3x6x8xf32>
    %18 = vector.shape_cast %17 : vector<1x3x6x8xf32> to vector<3x6x8xf32>
    %19 = arith.maximumf %16, %18 : vector<3x6x8xf32>
    %c7 = arith.constant 7 : index
    %c0_21 = arith.constant 0 : index
    %c0_22 = arith.constant 0 : index
    %c0_23 = arith.constant 0 : index
    %20 = vector.load %arg2[%c7, %c0_21, %c0_22, %c0_23] : memref<9x3x6x8xf32, #tpu.memory_space<vmem>>, vector<1x3x6x8xf32>
    %21 = vector.shape_cast %20 : vector<1x3x6x8xf32> to vector<3x6x8xf32>
    %22 = arith.maximumf %19, %21 : vector<3x6x8xf32>
    %c8 = arith.constant 8 : index
    %c0_24 = arith.constant 0 : index
    %c0_25 = arith.constant 0 : index
    %c0_26 = arith.constant 0 : index
    %23 = vector.load %arg2[%c8, %c0_24, %c0_25, %c0_26] : memref<9x3x6x8xf32, #tpu.memory_space<vmem>>, vector<1x3x6x8xf32>
    %24 = vector.shape_cast %23 : vector<1x3x6x8xf32> to vector<3x6x8xf32>
    %25 = arith.maximumf %22, %24 : vector<3x6x8xf32>
    %c0_27 = arith.constant 0 : index
    %c0_28 = arith.constant 0 : index
    %c0_29 = arith.constant 0 : index
    %26 = vector.load %arg3[%c0_27, %c0_28, %c0_29] : memref<3x6x8xf32, #tpu.memory_space<vmem>>, vector<3x6x8xf32>
    tpu.vector_store %arg3[%c0_27, %c0_28, %c0_29], %25 {strides = array<i32>} : memref<3x6x8xf32, #tpu.memory_space<vmem>>, vector<3x6x8xf32>,
    return
  }
  func.func @transform_0(%arg0: i32, %arg1: i32) -> (i32, i32, i32, i32) {
    %c0_i32 = arith.constant 0 : i32
    %c0_i32_0 = arith.constant 0 : i32
    %c0_i32_1 = arith.constant 0 : i32
    return %c0_i32, %arg1, %c0_i32_0, %arg0 : i32, i32, i32, i32
  }
  func.func @transform_1(%arg0: i32, %arg1: i32) -> (i32, i32, i32) {
    %c0_i32 = arith.constant 0 : i32
    %c0_i32_0 = arith.constant 0 : i32
    return %arg1, %c0_i32, %arg0 : i32, i32, i32
  }
}

</mosaic_0001>

<llo_original>
// kernel: maxpool2d_ceil.1
$region0: #{maxpool2d_ceil.1}
  #allocation0 [shape = 'u32[]', space=smem, size = 0x4, offset = 0x4, fixed_abs, tag = 'smem constant byte address 0x4 - core index']
  #allocation1 [shape = 'u32[72,128]{1,0:T(1,128)}', space=vmem, size = 0x9000, scoped, tag = 'internal scratch']
  %s0 = inlined_call_operand.vmem [shape: f32[9,6,6,8], index: 0, kind: input, shape index: {}]
  %s1 = inlined_call_operand.vmem [shape: f32[6,6,8], index: 1, kind: output, shape index: {}]
  %s2 = sld [smem:[#allocation0]]
  $region75: #{maxpool2d_ceil.1} parent=0
    _
  %s4 = ssub.s32 1, %s2
  %s5 = scalar_select 0, %s4, %s2
  $region1: #{maxpool2d_ceil.1} parent=0
    #allocation2 [shape = 'u8[221184]{0}', space=vmem, size = 0x36000, scoped, tag = 'input window, operand 0']
    loop: start=0, step=1, limit=4
    $region2: #{maxpool2d_ceil.1} parent=1 // loop_pre_header
      _
    $region3: #{maxpool2d_ceil.1} parent=1 // loop_header
      %s7 = sphi 0, %s11
      %p8 = scmp.ge.s32.totalorder %s7, 4
      %s14 = sphi 0, %s26
      %s15 = sphi 0, %s22
      %s16 = sphi 0, %s14
      %s17 = sphi 0, %s15
      %s18 = sphi 0, %s16
      %s19 = sphi 0, %s17
      %s31 = sphi 0, %s33
      %s34 = sphi 0, %s31
      %s35 = sphi 0, %s34
      %s51 = sphi 0, %s35
      %s59 = sphi 0, %s61
      %s62 = sphi 0, %s59
      %s63 = sphi 0, %s62
      %s79 = sphi 0, %s63
    $region4: #{maxpool2d_ceil.1} parent=1 // loop_header_branch
      %10 = sbr.rel (%p8) target = $region8
    $region5: #{maxpool2d_ceil.1} parent=1 // loop_body
      %s12 = ssub.s32 %s7, 1
      %s13 = ssub.s32 %s7, 2
      %s20 = sadd.s32 1, %s15
      %p21 = scmp.ge.s32.totalorder %s20, 2
      %s22 = scalar_select %p21, 0, %s20
      %s23 = sadd.s32 1, %s14
      %s24 = scalar_select %p21, %s23, %s14
      %p25 = scmp.ge.s32.totalorder %s24, 1
      %s26 = scalar_select %p25, 0, %s24
      %s27 = ssub.s32 %s15, %s22
      %s28 = ssub.s32 %s14, %s26
      %s29 = sor.u32 %s27, %s28
      %p30 = scmp.eq.s32.totalorder %s29, 0
      %s32 = sadd.s32 %s31, 1
      %s33 = scalar_select %p30, %s31, %s32
      %p36 = pneg %p30
      %p37 = scmp.eq.s32.totalorder %s7, 1
      %p38 = por %p36, %p37
      %p39 = scmp.ne.s32.totalorder %s31, %s34
      %p40 = scmp.eq.s32.totalorder %s7, 0
      %p41 = por %p39, %p40
      %p42 = scmp.ne.s32.totalorder %s31, %s34
      %p43 = scmp.eq.s32.totalorder %s12, 1
      %p44 = por %p42, %p43
      %p45 = scmp.ne.s32.totalorder %s34, %s35
      %p46 = scmp.eq.s32.totalorder %s12, 0
      %p47 = por %p45, %p46
      %p48 = scmp.ne.s32.totalorder %s34, %s35
      %p49 = scmp.eq.s32.totalorder %s13, 1
      %p50 = por %p48, %p49
      %p52 = scmp.ne.s32.totalorder %s35, %s51
      %p53 = scmp.eq.s32.totalorder %s13, 0
      %p54 = por %p52, %p53
      %s55 = ssub.s32 %s15, %s22
      %s56 = ssub.s32 %s14, %s26
      %s57 = sor.u32 %s55, %s56
      %p58 = scmp.eq.s32.totalorder %s57, 0
      %s60 = sadd.s32 %s59, 1
      %s61 = scalar_select %p58, %s59, %s60
      %p64 = pneg %p58
      %p65 = scmp.eq.s32.totalorder %s7, 1
      %p66 = por %p64, %p65
      %p67 = scmp.ne.s32.totalorder %s59, %s62
      %p68 = scmp.eq.s32.totalorder %s7, 0
      %p69 = por %p67, %p68
      %p70 = scmp.ne.s32.totalorder %s59, %s62
      %p71 = scmp.eq.s32.totalorder %s12, 1
      %p72 = por %p70, %p71
      %p73 = scmp.ne.s32.totalorder %s62, %s63
      %p74 = scmp.eq.s32.totalorder %s12, 0
      %p75 = por %p73, %p74
      %p76 = scmp.ne.s32.totalorder %s62, %s63
      %p77 = scmp.eq.s32.totalorder %s13, 1
      %p78 = por %p76, %p77
      %p80 = scmp.ne.s32.totalorder %s63, %s79
      %p81 = scmp.eq.s32.totalorder %s13, 0
      %p82 = por %p80, %p81
      %p83 = scmp.le.s32.totalorder 1, %s7
      %p84 = scmp.lt.s32.totalorder %s7, 3
      %p85 = pnand %p83, %p84
      %p86 = pneg %p85
      // Predicated region
      $region9: #{maxpool2d_ceil.1} parent=5 // pred_check
        _
      $region10: #{maxpool2d_ceil.1} parent=5 // pred_check_branch
        %88 = sbr.rel (%p85) target = $region12
      $region11: #{maxpool2d_ceil.1} parent=5 // pred_region
        %s89 = ssub.s32 %s7, 1
      $region12: #{maxpool2d_ceil.1} parent=5 // pred_fallthru
        _
      %p90 = scmp.lt.s32.totalorder %s7, 2
      // Predicated region
      $region13: #{maxpool2d_ceil.1} parent=5 // pred_check
        %p91 = pneg %p90
      $region14: #{maxpool2d_ceil.1} parent=5 // pred_check_branch
        %93 = sbr.rel (%p91) target = $region16
      $region15: #{maxpool2d_ceil.1} parent=5 // pred_region
        // Predicated region
        $region17: #{maxpool2d_ceil.1} parent=15 // pred_check
          %p94 = pneg %p41
        $region18: #{maxpool2d_ceil.1} parent=15 // pred_check_branch
          %96 = sbr.rel (%p94) target = $region20
        $region19: #{maxpool2d_ceil.1} parent=15 // pred_region
          %s97 = sand.u32 %s31, 1
          %s98 = sand.u32 %s31, 1
          %s99 = smul.addr %s98, 216
          %s100 = scalar_lea.vmem [#allocation2], %s99
          %s101 = smul.u32 3, %s15
          %s102 = sadd.s32 %s14, %s101
          %s103 = smul.addr %s102, 8
          %s104 = scalar_lea.vmem %s0, %s103
          // Predicated region
          $region21: #{maxpool2d_ceil.1} parent=19 // pred_check
            _
          $region22: #{maxpool2d_ceil.1} parent=19 // pred_check_branch
            %106 = sbr.rel (0) target = $region24
          $region23: #{maxpool2d_ceil.1} parent=19 // pred_region
            // Predicated region
            $region25: #{maxpool2d_ceil.1} parent=23 // pred_check
              _
            $region26: #{maxpool2d_ceil.1} parent=23 // pred_check_branch
              %108 = sbr.rel (0) target = $region28
            $region27: #{maxpool2d_ceil.1} parent=23 // pred_region
              // Predicated region
              $region40: #{maxpool2d_ceil.1} parent=27 // pred_check
                _
              $region41: #{maxpool2d_ceil.1} parent=27 // pred_check_branch
                %176 = sbr.rel (0) target = $region43
              $region42: #{maxpool2d_ceil.1} parent=27 // pred_region
                loop: start=0, step=1, limit=1
                $region44: #{maxpool2d_ceil.1} parent=42 // loop_pre_header
                  _
                $region45: #{maxpool2d_ceil.1} parent=42 // loop_header
                  %s178 = sphi 0, %s182
                  %p179 = scmp.ge.s32.totalorder %s178, 1
                  %s183 = sphi %s104, %s104
                  %s184 = sphi %s100, %s100
                $region46: #{maxpool2d_ceil.1} parent=42 // loop_header_branch
                  %181 = sbr.rel (%p179) target = $region50
                $region47: #{maxpool2d_ceil.1} parent=42 // loop_body
                  %v185 = vld [vmem:[%s183] sm:$0xff]
                  %186 = vst [vmem:[%s184] sm:$0xff] %v185
                  %v187 = vld [vmem:[%s183 + $0x8] sm:$0xff]
                  %188 = vst [vmem:[%s184 + $0x8] sm:$0xff] %v187
                  %v189 = vld [vmem:[%s183 + $0x10] sm:$0xff]
                  %190 = vst [vmem:[%s184 + $0x10] sm:$0xff] %v189
                  %v191 = vld [vmem:[%s183 + $0x30] sm:$0xff]
                  %192 = vst [vmem:[%s184 + $0x18] sm:$0xff] %v191
                  %v193 = vld [vmem:[%s183 + $0x38] sm:$0xff]
                  %194 = vst [vmem:[%s184 + $0x20] sm:$0xff] %v193
                  %v195 = vld [vmem:[%s183 + $0x40] sm:$0xff]
                  %196 = vst [vmem:[%s184 + $0x28] sm:$0xff] %v195
                  %v197 = vld [vmem:[%s183 + $0x60] sm:$0xff]
                  %198 = vst [vmem:[%s184 + $0x30] sm:$0xff] %v197
                  %v199 = vld [vmem:[%s183 + $0x68] sm:$0xff]
                  %200 = vst [vmem:[%s184 + $0x38] sm:$0xff] %v199
                  %v201 = vld [vmem:[%s183 + $0x70] sm:$0xff]
                  %202 = vst [vmem:[%s184 + $0x40] sm:$0xff] %v201
                  %v203 = vld [vmem:[%s183 + $0x90] sm:$0xff]
                  %204 = vst [vmem:[%s184 + $0x48] sm:$0xff] %v203
                  %v205 = vld [vmem:[%s183 + $0x98] sm:$0xff]
                  %206 = vst [vmem:[%s184 + $0x50] sm:$0xff] %v205
                  %v207 = vld [vmem:[%s183 + $0xa0] sm:$0xff]
                  %208 = vst [vmem:[%s184 + $0x58] sm:$0xff] %v207
                  %v209 = vld [vmem:[%s183 + $0xc0] sm:$0xff]
                  %210 = vst [vmem:[%s184 + $0x60] sm:$0xff] %v209
                  %v211 = vld [vmem:[%s183 + $0xc8] sm:$0xff]
                  %212 = vst [vmem:[%s184 + $0x68] sm:$0xff] %v211
                  %v213 = vld [vmem:[%s183 + $0xd0] sm:$0xff]
                  %214 = vst [vmem:[%s184 + $0x70] sm:$0xff] %v213
                  %v215 = vld [vmem:[%s183 + $0xf0] sm:$0xff]
                  %216 = vst [vmem:[%s184 + $0x78] sm:$0xff] %v215
                  %v217 = vld [vmem:[%s183 + $0xf8] sm:$0xff]
                  %218 = vst [vmem:[%s184 + $0x80] sm:$0xff] %v217
                  %v219 = vld [vmem:[%s183 + $0x100] sm:$0xff]
                  %220 = vst [vmem:[%s184 + $0x88] sm:$0xff] %v219
                  %v221 = vld [vmem:[%s183 + $0x120] sm:$0xff]
                  %222 = vst [vmem:[%s184 + $0x90] sm:$0xff] %v221
                  %v223 = vld [vmem:[%s183 + $0x128] sm:$0xff]
                  %224 = vst [vmem:[%s184 + $0x98] sm:$0xff] %v223
                  %v225 = vld [vmem:[%s183 + $0x130] sm:$0xff]
                  %226 = vst [vmem:[%s184 + $0xa0] sm:$0xff] %v225
                  %v227 = vld [vmem:[%s183 + $0x150] sm:$0xff]
                  %228 = vst [vmem:[%s184 + $0xa8] sm:$0xff] %v227
                  %v229 = vld [vmem:[%s183 + $0x158] sm:$0xff]
                  %230 = vst [vmem:[%s184 + $0xb0] sm:$0xff] %v229
                  %v231 = vld [vmem:[%s183 + $0x160] sm:$0xff]
                  %232 = vst [vmem:[%s184 + $0xb8] sm:$0xff] %v231
                  %v233 = vld [vmem:[%s183 + $0x180] sm:$0xff]
                  %234 = vst [vmem:[%s184 + $0xc0] sm:$0xff] %v233
                  %v235 = vld [vmem:[%s183 + $0x188] sm:$0xff]
                  %236 = vst [vmem:[%s184 + $0xc8] sm:$0xff] %v235
                  %v237 = vld [vmem:[%s183 + $0x190] sm:$0xff]
                  %238 = vst [vmem:[%s184 + $0xd0] sm:$0xff] %v237
                $region48: #{maxpool2d_ceil.1} parent=42 // loop_footer
                  %s182 = sadd.s32 1, %s178
                $region49: #{maxpool2d_ceil.1} parent=42 // loop_footer_branch
                  %177 = sbr.rel target = $region45
                $region50: #{maxpool2d_ceil.1} parent=42 // loop_exit
                  _
              $region43: #{maxpool2d_ceil.1} parent=27 // pred_fallthru
                _
              // Predicated region
              $region51: #{maxpool2d_ceil.1} parent=27 // pred_check
                _
              $region52: #{maxpool2d_ceil.1} parent=27 // pred_check_branch
                %240 = sbr.rel target = $region54
              $region53: #{maxpool2d_ceil.1} parent=27 // pred_region
                _
              $region54: #{maxpool2d_ceil.1} parent=27 // pred_fallthru
                _
            $region28: #{maxpool2d_ceil.1} parent=23 // pred_fallthru
              _
            // Predicated region
            $region29: #{maxpool2d_ceil.1} parent=23 // pred_check
              _
            $region30: #{maxpool2d_ceil.1} parent=23 // pred_check_branch
              %110 = sbr.rel target = $region32
            $region31: #{maxpool2d_ceil.1} parent=23 // pred_region
              %s112 = ssub.s32 256, 1
              loop: start=0, step=1, limit=1
              $region33: #{maxpool2d_ceil.1} parent=31 // loop_pre_header
                _
              $region34: #{maxpool2d_ceil.1} parent=31 // loop_header
                %s114 = sphi 0, %s118
                %p115 = scmp.ge.s32.totalorder %s114, 1
                %s119 = sphi %s104, %s104
                %s120 = sphi %s100, %s100
              $region35: #{maxpool2d_ceil.1} parent=31 // loop_header_branch
                %117 = sbr.rel (%p115) target = $region39
              $region36: #{maxpool2d_ceil.1} parent=31 // loop_body
                %v121 = vld [vmem:[%s119] sm:%s112]
                %122 = vst [vmem:[%s120] sm:%s112] %v121
                %v123 = vld [vmem:[%s119 + $0x8] sm:%s112]
                %124 = vst [vmem:[%s120 + $0x8] sm:%s112] %v123
                %v125 = vld [vmem:[%s119 + $0x10] sm:%s112]
                %126 = vst [vmem:[%s120 + $0x10] sm:%s112] %v125
                %v127 = vld [vmem:[%s119 + $0x30] sm:%s112]
                %128 = vst [vmem:[%s120 + $0x18] sm:%s112] %v127
                %v129 = vld [vmem:[%s119 + $0x38] sm:%s112]
                %130 = vst [vmem:[%s120 + $0x20] sm:%s112] %v129
                %v131 = vld [vmem:[%s119 + $0x40] sm:%s112]
                %132 = vst [vmem:[%s120 + $0x28] sm:%s112] %v131
                %v133 = vld [vmem:[%s119 + $0x60] sm:%s112]
                %134 = vst [vmem:[%s120 + $0x30] sm:%s112] %v133
                %v135 = vld [vmem:[%s119 + $0x68] sm:%s112]
                %136 = vst [vmem:[%s120 + $0x38] sm:%s112] %v135
                %v137 = vld [vmem:[%s119 + $0x70] sm:%s112]
                %138 = vst [vmem:[%s120 + $0x40] sm:%s112] %v137
                %v139 = vld [vmem:[%s119 + $0x90] sm:%s112]
                %140 = vst [vmem:[%s120 + $0x48] sm:%s112] %v139
                %v141 = vld [vmem:[%s119 + $0x98] sm:%s112]
                %142 = vst [vmem:[%s120 + $0x50] sm:%s112] %v141
                %v143 = vld [vmem:[%s119 + $0xa0] sm:%s112]
                %144 = vst [vmem:[%s120 + $0x58] sm:%s112] %v143
                %v145 = vld [vmem:[%s119 + $0xc0] sm:%s112]
                %146 = vst [vmem:[%s120 + $0x60] sm:%s112] %v145
                %v147 = vld [vmem:[%s119 + $0xc8] sm:%s112]
                %148 = vst [vmem:[%s120 + $0x68] sm:%s112] %v147
                %v149 = vld [vmem:[%s119 + $0xd0] sm:%s112]
                %150 = vst [vmem:[%s120 + $0x70] sm:%s112] %v149
                %v151 = vld [vmem:[%s119 + $0xf0] sm:%s112]
                %152 = vst [vmem:[%s120 + $0x78] sm:%s112] %v151
                %v153 = vld [vmem:[%s119 + $0xf8] sm:%s112]
                %154 = vst [vmem:[%s120 + $0x80] sm:%s112] %v153
                %v155 = vld [vmem:[%s119 + $0x100] sm:%s112]
                %156 = vst [vmem:[%s120 + $0x88] sm:%s112] %v155
                %v157 = vld [vmem:[%s119 + $0x120] sm:%s112]
                %158 = vst [vmem:[%s120 + $0x90] sm:%s112] %v157
                %v159 = vld [vmem:[%s119 + $0x128] sm:%s112]
                %160 = vst [vmem:[%s120 + $0x98] sm:%s112] %v159
                %v161 = vld [vmem:[%s119 + $0x130] sm:%s112]
                %162 = vst [vmem:[%s120 + $0xa0] sm:%s112] %v161
                %v163 = vld [vmem:[%s119 + $0x150] sm:%s112]
                %164 = vst [vmem:[%s120 + $0xa8] sm:%s112] %v163
                %v165 = vld [vmem:[%s119 + $0x158] sm:%s112]
                %166 = vst [vmem:[%s120 + $0xb0] sm:%s112] %v165
                %v167 = vld [vmem:[%s119 + $0x160] sm:%s112]
                %168 = vst [vmem:[%s120 + $0xb8] sm:%s112] %v167
                %v169 = vld [vmem:[%s119 + $0x180] sm:%s112]
                %170 = vst [vmem:[%s120 + $0xc0] sm:%s112] %v169
                %v171 = vld [vmem:[%s119 + $0x188] sm:%s112]
                %172 = vst [vmem:[%s120 + $0xc8] sm:%s112] %v171
                %v173 = vld [vmem:[%s119 + $0x190] sm:%s112]
                %174 = vst [vmem:[%s120 + $0xd0] sm:%s112] %v173
              $region37: #{maxpool2d_ceil.1} parent=31 // loop_footer
                %s118 = sadd.s32 1, %s114
              $region38: #{maxpool2d_ceil.1} parent=31 // loop_footer_branch
                %113 = sbr.rel target = $region34
              $region39: #{maxpool2d_ceil.1} parent=31 // loop_exit
                _
            $region32: #{maxpool2d_ceil.1} parent=23 // pred_fallthru
              _
          $region24: #{maxpool2d_ceil.1} parent=19 // pred_fallthru
            _
          %241 = vnop
        $region20: #{maxpool2d_ceil.1} parent=15 // pred_fallthru
          _
      $region16: #{maxpool2d_ceil.1} parent=5 // pred_fallthru
        _
      %p242 = scmp.le.s32.totalorder 1, %s7
      %p243 = scmp.lt.s32.totalorder %s7, 3
      %p244 = pnand %p242, %p243
      %p245 = pneg %p244
      // Predicated region
      $region55: #{maxpool2d_ceil.1} parent=5 // pred_check
        _
      $region56: #{maxpool2d_ceil.1} parent=5 // pred_check_branch
        %247 = sbr.rel (%p244) target = $region58
      $region57: #{maxpool2d_ceil.1} parent=5 // pred_region
        %s248 = ssub.s32 %s7, 1
        %s249 = sand.u32 %s34, 1
        %s250 = sand.u32 %s34, 1
        %s251 = smul.addr %s250, 216
        %s252 = scalar_lea.vmem [#allocation2], %s251
        // Predicated region
        $region59: #{maxpool2d_ceil.1} parent=57 // pred_check
          %p253 = pneg %p47
        $region60: #{maxpool2d_ceil.1} parent=57 // pred_check_branch
          %255 = sbr.rel (%p253) target = $region62
        $region61: #{maxpool2d_ceil.1} parent=57 // pred_region
          _
        $region62: #{maxpool2d_ceil.1} parent=57 // pred_fallthru
          _
        %s256 = sand.u32 %s34, 1
        %s257 = sand.u32 %s34, 1
        %s258 = smul.addr %s257, 216
        %s259 = scalar_lea.vmem [#allocation2], %s258
        %p260 = pneg %p47
        %p261 = pneg %p44
        %p262 = pneg %p75
        %p263 = pneg %p72
        %s264 = smul.u32 3, %s17
        %p265 = scmp.lt.s32.totalorder %s264, 5
        %s266 = scalar_select %p265, %s264, 5
        %p267 = scmp.lt.s32.totalorder %s16, 0
        %s268 = scalar_select %p267, %s16, 0
        %s269 = sadd.s32 %s268, %s266
        %s270 = smul.addr %s269, 8
        %s271 = scalar_lea.vmem %s1, %s270
        %s272 = smul.u32 3, %s17
        %s273 = smul.u32 3, %s17
        %p274 = scmp.lt.s32.totalorder %s273, 5
        %s275 = scalar_select %p274, %s273, 5
        %p276 = scmp.lt.s32.totalorder %s16, 0
        %s277 = scalar_select %p276, %s16, 0
        %s278 = sadd.s32 %s277, %s275
        %s279 = smul.addr %s278, 8
        %s280 = scalar_lea.vmem %s1, %s279
        %s281 = smul.u32 3, %s17
        %v282 = vld [vmem:[%s252] sm:$0x3f]
        %v283 = vld [vmem:[%s252 + $0x8] sm:$0x3f]
        %v284 = vld [vmem:[%s252 + $0x10] sm:$0x3f]
        %s285 = scalar_lea.vmem %s252, 24 [#allocation2]
        %v286 = vld [vmem:[%s285] sm:$0x3f]
        %v287 = vld [vmem:[%s285 + $0x8] sm:$0x3f]
        %v288 = vld [vmem:[%s285 + $0x10] sm:$0x3f]
        %v289 = vmax.f32 %v282, %v286
        %v290 = vmax.f32 %v283, %v287
        %v291 = vmax.f32 %v284, %v288
        %s292 = scalar_lea.vmem %s252, 48 [#allocation2]
        %v293 = vld [vmem:[%s292] sm:$0x3f]
        %v294 = vld [vmem:[%s292 + $0x8] sm:$0x3f]
        %v295 = vld [vmem:[%s292 + $0x10] sm:$0x3f]
        %v296 = vmax.f32 %v289, %v293
        %v297 = vmax.f32 %v290, %v294
        %v298 = vmax.f32 %v291, %v295
        %s299 = scalar_lea.vmem %s252, 72 [#allocation2]
        %v300 = vld [vmem:[%s299] sm:$0x3f]
        %v301 = vld [vmem:[%s299 + $0x8] sm:$0x3f]
        %v302 = vld [vmem:[%s299 + $0x10] sm:$0x3f]
        %v303 = vmax.f32 %v296, %v300
        %v304 = vmax.f32 %v297, %v301
        %v305 = vmax.f32 %v298, %v302
        %s306 = scalar_lea.vmem %s252, 96 [#allocation2]
        %v307 = vld [vmem:[%s306] sm:$0x3f]
        %v308 = vld [vmem:[%s306 + $0x8] sm:$0x3f]
        %v309 = vld [vmem:[%s306 + $0x10] sm:$0x3f]
        %v310 = vmax.f32 %v303, %v307
        %v311 = vmax.f32 %v304, %v308
        %v312 = vmax.f32 %v305, %v309
        %s313 = scalar_lea.vmem %s252, 120 [#allocation2]
        %v314 = vld [vmem:[%s313] sm:$0x3f]
        %v315 = vld [vmem:[%s313 + $0x8] sm:$0x3f]
        %v316 = vld [vmem:[%s313 + $0x10] sm:$0x3f]
        %v317 = vmax.f32 %v310, %v314
        %v318 = vmax.f32 %v311, %v315
        %v319 = vmax.f32 %v312, %v316
        %s320 = scalar_lea.vmem %s252, 144 [#allocation2]
        %v321 = vld [vmem:[%s320] sm:$0x3f]
        %v322 = vld [vmem:[%s320 + $0x8] sm:$0x3f]
        %v323 = vld [vmem:[%s320 + $0x10] sm:$0x3f]
        %v324 = vmax.f32 %v317, %v321
        %v325 = vmax.f32 %v318, %v322
        %v326 = vmax.f32 %v319, %v323
        %s327 = scalar_lea.vmem %s252, 168 [#allocation2]
        %v328 = vld [vmem:[%s327] sm:$0x3f]
        %v329 = vld [vmem:[%s327 + $0x8] sm:$0x3f]
        %v330 = vld [vmem:[%s327 + $0x10] sm:$0x3f]
        %v331 = vmax.f32 %v324, %v328
        %v332 = vmax.f32 %v325, %v329
        %v333 = vmax.f32 %v326, %v330
        %s334 = scalar_lea.vmem %s252, 192 [#allocation2]
        %v335 = vld [vmem:[%s334] sm:$0x3f]
        %v336 = vld [vmem:[%s334 + $0x8] sm:$0x3f]
        %v337 = vld [vmem:[%s334 + $0x10] sm:$0x3f]
        %v338 = vmax.f32 %v331, %v335
        %v339 = vmax.f32 %v332, %v336
        %v340 = vmax.f32 %v333, %v337
        %vm341 = vcmask 62464
        %342 = vst.msk [vmem:[%s280] sm:$0x3f] %vm341, %v338
        %343 = vst.msk [vmem:[%s280 + $0x8] sm:$0x3f] %vm341, %v339
        %344 = vst.msk [vmem:[%s280 + $0x10] sm:$0x3f] %vm341, %v340
        %s345 = smul.u32 3, %s17
        %p346 = scmp.lt.s32.totalorder %s345, 5
        %s347 = scalar_select %p346, %s345, 5
        %p348 = scmp.lt.s32.totalorder %s16, 0
        %s349 = scalar_select %p348, %s16, 0
        %s350 = sadd.s32 %s349, %s347
        %s351 = smul.addr %s350, 8
        %s352 = scalar_lea.vmem %s1, %s351
        // Predicated region
        $region63: #{maxpool2d_ceil.1} parent=57 // pred_check
          %p353 = pneg %p72
        $region64: #{maxpool2d_ceil.1} parent=57 // pred_check_branch
          %355 = sbr.rel (%p353) target = $region66
        $region65: #{maxpool2d_ceil.1} parent=57 // pred_region
          %s356 = smul.u32 3, %s17
        $region66: #{maxpool2d_ceil.1} parent=57 // pred_fallthru
          _
      $region58: #{maxpool2d_ceil.1} parent=5 // pred_fallthru
        _
      %p357 = scmp.le.s32.totalorder 2, %s7
      // Predicated region
      $region67: #{maxpool2d_ceil.1} parent=5 // pred_check
        %p358 = pneg %p357
      $region68: #{maxpool2d_ceil.1} parent=5 // pred_check_branch
        %360 = sbr.rel (%p358) target = $region70
      $region69: #{maxpool2d_ceil.1} parent=5 // pred_region
        %s361 = ssub.s32 %s7, 2
        // Predicated region
        $region71: #{maxpool2d_ceil.1} parent=69 // pred_check
          %p362 = pneg %p78
        $region72: #{maxpool2d_ceil.1} parent=69 // pred_check_branch
          %364 = sbr.rel (%p362) target = $region74
        $region73: #{maxpool2d_ceil.1} parent=69 // pred_region
          %s365 = smul.u32 3, %s19
          %p366 = scmp.lt.s32.totalorder %s365, 5
          %s367 = scalar_select %p366, %s365, 5
          %p368 = scmp.lt.s32.totalorder %s18, 0
          %s369 = scalar_select %p368, %s18, 0
          %s370 = sadd.s32 %s369, %s367
          %s371 = smul.addr %s370, 8
          %s372 = scalar_lea.vmem %s1, %s371
        $region74: #{maxpool2d_ceil.1} parent=69 // pred_fallthru
          _
      $region70: #{maxpool2d_ceil.1} parent=5 // pred_fallthru
        _
    $region6: #{maxpool2d_ceil.1} parent=1 // loop_footer
      %s11 = sadd.s32 1, %s7
    $region7: #{maxpool2d_ceil.1} parent=1 // loop_footer_branch
      %6 = sbr.rel target = $region3
    $region8: #{maxpool2d_ceil.1} parent=1 // loop_exit
      _

</llo_original>
